<compile_context>
chip_gen: v5e
topology: v5e:2x2
jax: 0.10.0
libtpu: 0.0.40
codegen_flags: <defaults>
</compile_context>

<pallas_src>
import functools

import jax
import jax.numpy as jnp
from jax import lax
from jax.experimental import pallas as pl
from jax.experimental.pallas import tpu as pltpu


# ---------------------------------------------------------------------------
# Kernels
# ---------------------------------------------------------------------------

def _delta_kernel(x_ref, o_ref, *, half: int, scale: float):
    """Whole-sequence reduction.

    x_ref: (TB, S, TD) input tile; o_ref: (TB, TD) lane-dense output tile.
    Delta weights are +/-(2/S): compute (sum of second half - sum of first half)
    and scale the small (TB, TD) result once.  Accumulation is in f32.
    """
    pos = jnp.sum(x_ref[:, half:, :], axis=1, dtype=jnp.float32)
    if half > 0:
        neg = jnp.sum(x_ref[:, :half, :], axis=1, dtype=jnp.float32)
        res = pos - neg
    else:
        res = pos
    o_ref[...] = (res * scale).astype(o_ref.dtype)


def _delta_kernel_s_tiled(x_ref, o_ref, acc_ref, *, ts: int, s_total: int,
                          half: int, scale: float):
    """Sequence-tiled reduction for very long sequences (bounded VMEM blocks).

    Grid axis 2 walks S in chunks of `ts`; acc_ref (TB, TD) f32 is the resident
    accumulator.  Overhang rows of a partial last chunk are masked to zero before
    they can touch the accumulator.
    """
    k = pl.program_id(2)

    @pl.when(k == 0)
    def _init():
        acc_ref[...] = jnp.zeros_like(acc_ref)

    idx = k * ts + lax.broadcasted_iota(jnp.int32, (1, ts, 1), 1)   # global seq index
    x = x_ref[...]
    x = jnp.where(idx < s_total, x, 0)                              # mask S overhang
    sign = jnp.where(idx < half, jnp.float32(-1.0), jnp.float32(1.0))
    acc_ref[...] += jnp.sum(x * sign, axis=1, dtype=jnp.float32)

    @pl.when(k == pl.num_programs(2) - 1)
    def _finalize():
        o_ref[...] = (acc_ref[...] * scale).astype(o_ref.dtype)


# ---------------------------------------------------------------------------
# Wrapper
# ---------------------------------------------------------------------------

def _hw_budgets():
    """Return (per-block byte budget, scoped VMEM limit), generation aware."""
    vmem_bytes = 64 * 1024 * 1024                      # assume smallest (v7x per-TC)
    try:
        vmem_bytes = int(pltpu.get_tpu_info().vmem_capacity_bytes)
    except Exception:
        pass
    if vmem_bytes >= 128 * 1024 * 1024:                # v5e / v6e: room for bigger blocks
        return 16 * 1024 * 1024, 48 * 1024 * 1024
    return 8 * 1024 * 1024, 32 * 1024 * 1024           # v7x-safe


def make_delta_weight(seq_len: int) -> jnp.ndarray:
    """Reference weight matching Delta.__init__ (used only for validation)."""
    base = jnp.full((seq_len,), 2.0 / seq_len, dtype=jnp.float32)
    sign = jnp.where(jnp.arange(seq_len) < seq_len // 2, -1.0, 1.0).astype(jnp.float32)
    return base * sign


def delta_forward(x: jnp.ndarray) -> jnp.ndarray:
    """x: (B, S, D) -> delta: (B, D) with delta[b, d] = sum_s x[b, s, d] * weight[s]."""
    B, S, D = x.shape
    itemsize = jnp.dtype(x.dtype).itemsize
    half = S // 2
    scale = 2.0 / S

    block_budget, vmem_limit = _hw_budgets()
    sub = max(8, 32 // itemsize)                       # packed sublane count per dtype

    # ---- lane (feature) tiling: prefer full-D contiguous rows; shrink only if needed.
    td_cands = [D]
    for c in (4096, 2048, 1024, 512, 256, 128):
        if c < D and D % c == 0:
            td_cands.append(c)
    if D > 128 and D % 128 != 0:
        td_cands.append(128)                           # last resort: partial lane block

    TD = None
    for c in td_cands:
        if sub * S * c * itemsize <= block_budget:
            TD = c
            break

    if TD is not None:
        # -------- main path: whole sequence fits in one block --------------------
        tb = block_budget // (S * TD * itemsize)
        if tb >= B:
            TB = B
        else:
            TB = max(sub, (tb // sub) * sub)           # sublane-aligned batch block

        # Keep >=2 grid steps on non-tiny batches so both v7x TCs get work and the
        # pipeline overlaps DMA with compute.
        if TB == B and TD == D and B >= 2 * sub:
            half_b = -(-B // 2)
            TB = ((half_b + sub - 1) // sub) * sub

        grid = (pl.cdiv(B, TB), pl.cdiv(D, TD))
        return pl.pallas_call(
            functools.partial(_delta_kernel, half=half, scale=scale),
            out_shape=jax.ShapeDtypeStruct((B, D), x.dtype),
            grid=grid,
            in_specs=[pl.BlockSpec((TB, S, TD), lambda b, d: (b, 0, d))],
            out_specs=pl.BlockSpec((TB, TD), lambda b, d: (b, d)),
            compiler_params=pltpu.CompilerParams(
                dimension_semantics=("parallel", "parallel"),
                vmem_limit_bytes=vmem_limit,
            ),
        )(x)

    # -------- fallback: sequence too long for a single block -> S-tiled reduction ----
    TD = td_cands[-1]
    TB = sub if B >= sub else B
    ts = max(8, ((block_budget // (TB * TD * itemsize)) // 8) * 8)
    TS = min(ts, ((S + 7) // 8) * 8)

    grid = (pl.cdiv(B, TB), pl.cdiv(D, TD), pl.cdiv(S, TS))
    return pl.pallas_call(
        functools.partial(_delta_kernel_s_tiled, ts=TS, s_total=S,
                          half=half, scale=scale),
        out_shape=jax.ShapeDtypeStruct((B, D), x.dtype),
        grid=grid,
        in_specs=[pl.BlockSpec((TB, TS, TD), lambda b, d, k: (b, k, d))],
        out_specs=pl.BlockSpec((TB, TD), lambda b, d, k: (b, d)),
        scratch_shapes=[pltpu.VMEM((TB, TD), jnp.float32)],
        compiler_params=pltpu.CompilerParams(
            dimension_semantics=("parallel", "parallel", "arbitrary"),
            vmem_limit_bytes=vmem_limit,
        ),
    )(x)


if __name__ == "__main__":
    # Small shapes consistent with the module: batch=2, seqL=8, inDims=32.
    B, seqL, inDims = 2, 8, 32

    key = jax.random.PRNGKey(0)
    x = jax.random.normal(key, (B, seqL, inDims), dtype=jnp.float32)

    delta = jax.block_until_ready(delta_forward(x))

    # Pure-JAX reference: matmul(x.permute(0,2,1), weight) == einsum('bsd,s->bd')
    ref = jnp.einsum("bsd,s->bd", x, make_delta_weight(seqL))
    assert delta.shape == (B, inDims)
    assert jnp.allclose(delta, ref, atol=1e-5, rtol=1e-5)

    print("KERNEL_OK")
</pallas_src>

<mosaic_0001>
module attributes {stable_mosaic.version = 11 : i64} {
  func.func @_delta_kernel(%arg0: i32, %arg1: i32, %arg2: memref<2x8x32xf32, #tpu.memory_space<vmem>>, %arg3: memref<2x32xf32, #tpu.memory_space<vmem>>) attributes {dimension_semantics = [#tpu.dimension_semantics<parallel>, #tpu.dimension_semantics<parallel>], iteration_bounds = array<i64: 1, 1>, scalar_prefetch = 0 : i64, scratch_operands = 0 : i64, tpu.core_type = #tpu.core_type<tc>, window_params = [{transform_indices = @transform_0, window_bounds = array<i64: 2, 8, 32>}, {transform_indices = @transform_1, window_bounds = array<i64: 2, 32>}]} {
    %c0 = arith.constant 0 : index
    %c4 = arith.constant 4 : index
    %c0_0 = arith.constant 0 : index
    %0 = vector.load %arg2[%c0, %c4, %c0_0] : memref<2x8x32xf32, #tpu.memory_space<vmem>>, vector<2x4x32xf32>
    %cst = arith.constant dense<0.000000e+00> : vector<2x32xf32>
    %1 = vector.multi_reduction <add>, %0, %cst [1] : vector<2x4x32xf32> to vector<2x32xf32>
    %c0_1 = arith.constant 0 : index
    %c0_2 = arith.constant 0 : index
    %c0_3 = arith.constant 0 : index
    %2 = vector.load %arg2[%c0_1, %c0_2, %c0_3] : memref<2x8x32xf32, #tpu.memory_space<vmem>>, vector<2x4x32xf32>
    %cst_4 = arith.constant dense<0.000000e+00> : vector<2x32xf32>
    %3 = vector.multi_reduction <add>, %2, %cst_4 [1] : vector<2x4x32xf32> to vector<2x32xf32>
    %4 = arith.subf %1, %3 : vector<2x32xf32>
    %cst_5 = arith.constant 2.500000e-01 : f32
    %5 = vector.broadcast %cst_5 : f32 to vector<2x32xf32>
    %6 = arith.mulf %4, %5 : vector<2x32xf32>
    %c0_6 = arith.constant 0 : index
    %c0_7 = arith.constant 0 : index
    %7 = vector.load %arg3[%c0_6, %c0_7] : memref<2x32xf32, #tpu.memory_space<vmem>>, vector<2x32xf32>
    tpu.vector_store %arg3[%c0_6, %c0_7], %6 {strides = array<i32>} : memref<2x32xf32, #tpu.memory_space<vmem>>, vector<2x32xf32>,
    return
  }
  func.func @transform_0(%arg0: i32, %arg1: i32) -> (i32, i32, i32) {
    %c0_i32 = arith.constant 0 : i32
    %c0_i32_0 = arith.constant 0 : i32
    return %arg0, %c0_i32, %arg1 : i32, i32, i32
  }
  func.func @transform_1(%arg0: i32, %arg1: i32) -> (i32, i32) {
    %c0_i32 = arith.constant 0 : i32
    return %arg0, %arg1 : i32, i32
  }
}

</mosaic_0001>

<llo_original>
// kernel: tpu_custom_call.1
$region0: #{tpu_custom_call.1}
  #allocation0 [shape = 'u32[]', space=smem, size = 0x4, offset = 0x4, fixed_abs, tag = 'smem constant byte address 0x4 - core index']
  #allocation1 [shape = 'u32[72,128]{1,0:T(1,128)}', space=vmem, size = 0x9000, scoped, tag = 'internal scratch']
  %s0 = inlined_call_operand.hbm [shape: f32[2,8,32], index: 0, kind: input, shape index: {}]
  %s1 = inlined_call_operand.hbm [shape: f32[2,32], index: 1, kind: output, shape index: {}]
  %s2 = sld [smem:[#allocation0]]
  $region18: #{tpu_custom_call.1} parent=0
    _
  %s4 = ssub.s32 1, %s2
  %s5 = scalar_select 0, %s4, %s2
  $region1: #{tpu_custom_call.1} parent=0
    #allocation2 [shape = 'u8[8192]{0}', space=vmem, size = 0x2000, scoped, tag = 'input window, operand 0, single buffered']
    #allocation3 [shape = 's32[1]{0}', space=sflag, size = 0x4, scoped, tag = 'scoped memory for tpu_custom_call.1']
    #allocation4 [shape = 's32[1]{0}', space=sflag, size = 0x4, scoped, tag = 'scoped memory for tpu_custom_call.1']
    #allocation5 [shape = 'u8[1024]{0}', space=vmem, size = 0x400, scoped, tag = 'output window, operand 0, single buffered']
    %6 = vsyncpa [#allocation3], 0
    %7 = vsyncpa [#allocation4], 0
    // Predicated region
    $region2: #{tpu_custom_call.1} parent=1 // pred_check
      _
    $region3: #{tpu_custom_call.1} parent=1 // pred_check_branch
      %9 = sbr.rel (0) target = $region5
    $region4: #{tpu_custom_call.1} parent=1 // pred_region
      %11 = vsyncadd [#allocation3], 0
      %s12 = sshll.u32 %s0, 4
      %s13 = int_to_ptr.hbm [resolvable:$true] %s12
      %s14 = sshll.u32 [#allocation2], 4
      %s15 = int_to_ptr.vmem [resolvable:$true] %s14
      %20 = dma.hbm_to_vmem [thread:$0]  %s13, 256, %s15, [#allocation3], 128, 128, 8
    $region5: #{tpu_custom_call.1} parent=1 // pred_fallthru
      _
    // Predicated region
    $region6: #{tpu_custom_call.1} parent=1 // pred_check
      _
    $region7: #{tpu_custom_call.1} parent=1 // pred_check_branch
      %22 = sbr.rel (0) target = $region9
    $region8: #{tpu_custom_call.1} parent=1 // pred_region
      %24 = dma.done [#allocation3], 256
    $region9: #{tpu_custom_call.1} parent=1 // pred_fallthru
      _
    %v25 = vld [vmem:[#allocation2 + $0x4] sm:$0xf]
    %v26 = vld [vmem:[#allocation2 + $0xc] sm:$0xf]
    %vm27 = vcmask 257024
    %v28 = vsel %vm27, %v25, 0.0
    %v29 = vrot.slane %v28, 4
    %v30 = vadd.f32 %v28, %v29
    %v31 = vrot.slane %v30, 2
    %v32 = vadd.f32 %v30, %v31
    %v33 = vrot.slane %v32, 1
    %v34 = vadd.f32 %v32, %v33
    %v35 = vsel %vm27, %v26, 0.0
    %v36 = vrot.slane %v35, 4
    %v37 = vadd.f32 %v35, %v36
    %v38 = vrot.slane %v37, 2
    %v39 = vadd.f32 %v37, %v38
    %v40 = vrot.slane %v39, 1
    %v41 = vadd.f32 %v39, %v40
    %v42 = vld [vmem:[#allocation2] sm:$0xf]
    %v43 = vld [vmem:[#allocation2 + $0x8] sm:$0xf]
    %v44 = vsel %vm27, %v42, 0.0
    %v45 = vrot.slane %v44, 4
    %v46 = vadd.f32 %v44, %v45
    %v47 = vrot.slane %v46, 2
    %v48 = vadd.f32 %v46, %v47
    %v49 = vrot.slane %v48, 1
    %v50 = vadd.f32 %v48, %v49
    %v51 = vsel %vm27, %v43, 0.0
    %v52 = vrot.slane %v51, 4
    %v53 = vadd.f32 %v51, %v52
    %v54 = vrot.slane %v53, 2
    %v55 = vadd.f32 %v53, %v54
    %v56 = vrot.slane %v55, 1
    %v57 = vadd.f32 %v55, %v56
    %v58 = vsub.f32 %v34, %v50
    %v59 = vsub.f32 %v41, %v57
    %v60 = vmul.f32 %v58, 0.25
    %v61 = vmul.f32 %v59, 0.25
    %vm64 = vcmask 1041409
    %v65 = vsel %vm64, %v61, %v60
    %vm67 = vcmask 254976
    %68 = vst.msk [vmem:[#allocation5] sm:$0x3] %vm67, %v65
    // Predicated region
    $region10: #{tpu_custom_call.1} parent=1 // pred_check
      _
    $region11: #{tpu_custom_call.1} parent=1 // pred_check_branch
      %70 = sbr.rel (0) target = $region13
    $region12: #{tpu_custom_call.1} parent=1 // pred_region
      %72 = vsyncadd [#allocation4], 0
      %s74 = sshll.u32 [#allocation5], 4
      %s75 = int_to_ptr.vmem [resolvable:$true] %s74
      %s76 = sshll.u32 %s1, 4
      %s77 = int_to_ptr.hbm [resolvable:$true] %s76
      %79 = dma.vmem_to_hbm [thread:$0]  %s75, 32, %s77, [#allocation4]
    $region13: #{tpu_custom_call.1} parent=1 // pred_fallthru
      _
    // Predicated region
    $region14: #{tpu_custom_call.1} parent=1 // pred_check
      _
    $region15: #{tpu_custom_call.1} parent=1 // pred_check_branch
      %81 = sbr.rel (0) target = $region17
    $region16: #{tpu_custom_call.1} parent=1 // pred_region
      %83 = dma.done [#allocation4], 32
    $region17: #{tpu_custom_call.1} parent=1 // pred_fallthru
      _
    %84 = vsyncpa [#allocation3], 1
    %85 = vsyncpa [#allocation4], 1

</llo_original>
